<compile_context>
chip_gen: v7x
topology: tpu7x:2x2x1
jax: 0.10.0
libtpu: 0.0.40
codegen_flags: <defaults>
</compile_context>

<pallas_src>
import math

import jax
import jax.numpy as jnp
from jax.experimental import pallas as pl
from jax.experimental.pallas import tpu as pltpu


_VMEM_LIMIT = 32 * 1024 * 1024       # scoped VMEM limit requested from Mosaic
_VMEM_BUDGET = 24 * 1024 * 1024      # what our (double-buffered) tiles may use
_TARGET_OUT_BLOCK = 4 * 1024 * 1024  # per-grid-step output block size target


def _device_has_multiple_tensorcores():
    """True on chips with >1 TensorCore per device (v7x-style megacore)."""
    try:
        kind = jax.devices()[0].device_kind.lower()
    except Exception:
        return False
    return ("v7" in kind) or ("tpu7" in kind) or ("7x" in kind)


def _choose_block_planes(nc, in_plane_bytes, out_plane_bytes, multicore):
    """Largest plane count per grid step within the VMEM budget / block target.

    On single-TC generations take the biggest block (the grid is a serial loop,
    extra steps are pure overhead); on multi-core chips keep >=2 grid steps so
    both TensorCores get work.
    """
    per_plane = 2 * (in_plane_bytes + out_plane_bytes) + out_plane_bytes
    cap_vmem = max(1, _VMEM_BUDGET // per_plane)
    cap_target = max(1, _TARGET_OUT_BLOCK // max(out_plane_bytes, 1))
    cap = min(cap_vmem, cap_target)
    if multicore and nc >= 2:
        cap = min(cap, pl.cdiv(nc, 2))
    return min(nc, cap)


def _grid_semantics(multicore):
    """Preferred dimension_semantics for the fused (N*C) grid axis."""
    if multicore:
        core_parallel = getattr(pltpu, "CORE_PARALLEL", "parallel")
        return [core_parallel, "parallel"]   # fall back if rejected
    return ["parallel"]


def _pad_pallas(kernel, x2, out_shape, in_block, out_block, index_map, grid,
                semantics_options):
    err = None
    for sem in semantics_options:
        call = pl.pallas_call(
            kernel,
            out_shape=jax.ShapeDtypeStruct(out_shape, x2.dtype),
            grid=(grid,),
            in_specs=[pl.BlockSpec(in_block, index_map)],
            out_specs=pl.BlockSpec(out_block, index_map),
            compiler_params=pltpu.CompilerParams(
                dimension_semantics=(sem,),
                vmem_limit_bytes=_VMEM_LIMIT,
            ),
        )
        try:
            return call(x2)
        except Exception as e:  # only hit when a semantics option is rejected
            err = e
    raise err


def conv2d_same_pad(x, kernel_size, stride):
    """TF 'SAME' padding semantics, matching the PyTorch Conv2dSamePad module.

    x: (N, C, H, W). Returns (N, C, H + pad_along_h, W + pad_along_w), zero
    padded, with the extra odd pixel going to bottom/right (TF convention).
    """
    ks = list(kernel_size) if isinstance(kernel_size, (list, tuple)) else [kernel_size, kernel_size]
    st = list(stride) if isinstance(stride, (list, tuple)) else [stride, stride]

    n, c, in_h, in_w = x.shape
    out_h = math.ceil(float(in_h) / float(st[0]))
    out_w = math.ceil(float(in_w) / float(st[1]))
    pad_along_h = max((out_h - 1) * st[0] + ks[0] - in_h, 0)
    pad_along_w = max((out_w - 1) * st[1] + ks[1] - in_w, 0)
    pad_top = pad_along_h // 2
    pad_bottom = pad_along_h - pad_top
    pad_left = pad_along_w // 2
    pad_right = pad_along_w - pad_left

    if pad_along_h == 0 and pad_along_w == 0:
        return x  # nothing to pad; avoid a pure-copy kernel

    padded_h = in_h + pad_along_h
    padded_w = in_w + pad_along_w

    nc = n * c
    itemsize = jnp.dtype(x.dtype).itemsize
    in_plane_bytes = in_h * in_w * itemsize
    out_plane_bytes = padded_h * padded_w * itemsize

    # Guard: a single plane (double-buffered in+out plus the in-kernel temp)
    # must fit the VMEM budget; otherwise let XLA handle it.
    # TODO(synk): add an H-blocked grid (row tiles + pad_top branch on the row
    # block index) so huge planes stay in Pallas instead of falling back.
    if 2 * (in_plane_bytes + out_plane_bytes) + out_plane_bytes > _VMEM_BUDGET:
        return jnp.pad(x, ((0, 0), (0, 0), (pad_top, pad_bottom), (pad_left, pad_right)))

    multicore = _device_has_multiple_tensorcores()
    block_c = _choose_block_planes(nc, in_plane_bytes, out_plane_bytes, multicore)
    semantics = _grid_semantics(multicore)
    dt = x.dtype

    if pad_along_w == 0:
        # Lane-dense path: only H padding.  Flatten (H, W) -> (H*W,) so the
        # last block dim is a long contiguous run (dense vld/vst + DMA rows);
        # H padding becomes a prefix/suffix of zeros in the flat axis.
        sub = 8 * max(1, 4 // itemsize)  # sublane multiple for this dtype
        if block_c != nc and block_c % sub != 0:
            block_c = (block_c // sub) * sub
            if block_c == 0:
                block_c = nc
        in_last = in_h * in_w
        out_last = padded_h * in_w
        x2 = x.reshape(nc, in_last)

        def pad_kernel(x_ref, o_ref):
            parts = []
            if pad_top:
                parts.append(jnp.zeros((block_c, pad_top * in_w), dt))
            parts.append(x_ref[...])
            if pad_bottom:
                parts.append(jnp.zeros((block_c, pad_bottom * in_w), dt))
            padded = parts[0] if len(parts) == 1 else jnp.concatenate(parts, axis=1)
            o_ref[...] = padded  # single full-block store

        grid = pl.cdiv(nc, block_c)
        out2 = _pad_pallas(pad_kernel, x2, (nc, out_last),
                           (block_c, in_last), (block_c, out_last),
                           lambda i: (i, 0), grid, semantics)
        return out2.reshape(n, c, padded_h, in_w)

    # General path: pad W (lanes) then H (sublanes) in-value, store once.
    x2 = x.reshape(nc, in_h, in_w)

    def pad_kernel(x_ref, o_ref):
        v = x_ref[...]
        wp = []
        if pad_left:
            wp.append(jnp.zeros((block_c, in_h, pad_left), dt))
        wp.append(v)
        if pad_right:
            wp.append(jnp.zeros((block_c, in_h, pad_right), dt))
        v = wp[0] if len(wp) == 1 else jnp.concatenate(wp, axis=2)
        hp = []
        if pad_top:
            hp.append(jnp.zeros((block_c, pad_top, padded_w), dt))
        hp.append(v)
        if pad_bottom:
            hp.append(jnp.zeros((block_c, pad_bottom, padded_w), dt))
        v = hp[0] if len(hp) == 1 else jnp.concatenate(hp, axis=1)
        o_ref[...] = v  # single full-block store

    grid = pl.cdiv(nc, block_c)
    out2 = _pad_pallas(pad_kernel, x2, (nc, padded_h, padded_w),
                       (block_c, in_h, in_w), (block_c, padded_h, padded_w),
                       lambda i: (i, 0, 0), grid, semantics)
    return out2.reshape(n, c, padded_h, padded_w)


def _reference_same_pad(x, kernel_size, stride):
    """Pure-JAX reference: same math as the PyTorch Conv2dSamePad module."""
    ks = list(kernel_size) if isinstance(kernel_size, (list, tuple)) else [kernel_size, kernel_size]
    st = list(stride) if isinstance(stride, (list, tuple)) else [stride, stride]
    in_h, in_w = x.shape[2], x.shape[3]
    out_h = math.ceil(float(in_h) / float(st[0]))
    out_w = math.ceil(float(in_w) / float(st[1]))
    pah = max((out_h - 1) * st[0] + ks[0] - in_h, 0)
    paw = max((out_w - 1) * st[1] + ks[1] - in_w, 0)
    pt, plf = pah // 2, paw // 2
    return jnp.pad(x, ((0, 0), (0, 0), (pt, pah - pt), (plf, paw - plf)))


if __name__ == "__main__":
    key = jax.random.PRNGKey(0)
    # Small NCHW input consistent with the module's forward (conv-style input).
    x = jax.random.normal(key, (2, 4, 16, 16), dtype=jnp.float32)

    configs = [
        (3, 2),        # asymmetric pad (bottom/right only), both H and W
        (3, 1),        # symmetric pad, all four borders
        ((3, 1), 1),   # H-only pad -> lane-dense flattened path
        ((1, 3), 1),   # W-only pad -> general path, lane padding only
        (1, 1),        # no pad -> early return
    ]
    for kernel_size, stride in configs:
        out = jax.block_until_ready(conv2d_same_pad(x, kernel_size, stride))
        ref = _reference_same_pad(x, kernel_size, stride)
        assert out.shape == ref.shape, (kernel_size, stride, out.shape, ref.shape)
        assert jnp.array_equal(out, ref), f"mismatch vs reference for k={kernel_size}, s={stride}"

    print("KERNEL_OK")
</pallas_src>

<mosaic_0001>
module attributes {stable_mosaic.version = 11 : i64} {
  func.func @pad_kernel(%arg0: i32, %arg1: memref<8x16x16xf32, #tpu.memory_space<vmem>>, %arg2: memref<8x17x17xf32, #tpu.memory_space<vmem>>) attributes {dimension_semantics = [#tpu.dimension_semantics<parallel>], iteration_bounds = array<i64: 1>, scalar_prefetch = 0 : i64, scratch_operands = 0 : i64, tpu.core_type = #tpu.core_type<tc>, window_params = [{transform_indices = @transform_0, window_bounds = array<i64: 8, 16, 16>}, {transform_indices = @transform_1, window_bounds = array<i64: 8, 17, 17>}]} {
    %c0 = arith.constant 0 : index
    %c0_0 = arith.constant 0 : index
    %c0_1 = arith.constant 0 : index
    %0 = vector.load %arg1[%c0, %c0_0, %c0_1] : memref<8x16x16xf32, #tpu.memory_space<vmem>>, vector<8x16x16xf32>
    %cst = arith.constant 0.000000e+00 : f32
    %1 = vector.broadcast %cst : f32 to vector<8x16x1xf32>
    %2 = tpu.concatenate %0, %1 in 2 : vector<8x16x16xf32>, vector<8x16x1xf32> -> vector<8x16x17xf32>
    %cst_2 = arith.constant 0.000000e+00 : f32
    %3 = vector.broadcast %cst_2 : f32 to vector<8x1x17xf32>
    %4 = tpu.concatenate %2, %3 in 1 : vector<8x16x17xf32>, vector<8x1x17xf32> -> vector<8x17x17xf32>
    %c0_3 = arith.constant 0 : index
    %c0_4 = arith.constant 0 : index
    %c0_5 = arith.constant 0 : index
    %5 = vector.load %arg2[%c0_3, %c0_4, %c0_5] : memref<8x17x17xf32, #tpu.memory_space<vmem>>, vector<8x17x17xf32>
    tpu.vector_store %arg2[%c0_3, %c0_4, %c0_5], %4 {strides = array<i32>} : memref<8x17x17xf32, #tpu.memory_space<vmem>>, vector<8x17x17xf32>,
    return
  }
  func.func @transform_0(%arg0: i32) -> (i32, i32, i32) {
    %c0_i32 = arith.constant 0 : i32
    %c0_i32_0 = arith.constant 0 : i32
    %c0_i32_1 = arith.constant 0 : i32
    return %arg0, %c0_i32, %c0_i32_0 : i32, i32, i32
  }
  func.func @transform_1(%arg0: i32) -> (i32, i32, i32) {
    %c0_i32 = arith.constant 0 : i32
    %c0_i32_0 = arith.constant 0 : i32
    %c0_i32_1 = arith.constant 0 : i32
    return %arg0, %c0_i32, %c0_i32_0 : i32, i32, i32
  }
}

</mosaic_0001>

<llo_original>
// kernel: tpu_custom_call.1
$region0: #{tpu_custom_call.1}
  #allocation0 [shape = 'u32[]', space=smem, size = 0x4, offset = 0x4, fixed_abs, tag = 'smem constant byte address 0x4 - core index']
  #allocation1 [shape = 'u32[144,128]{1,0:T(1,128)}', space=vmem, size = 0x12000, scoped, tag = 'internal scratch']
  %s0 = inlined_call_operand.hbm [shape: f32[8,16,16], index: 0, kind: input, shape index: {}]
  %s1 = inlined_call_operand.vmem [shape: f32[8,17,17], index: 1, kind: output, shape index: {}]
  %s2 = sld [smem:[#allocation0]]
  $region18: #{tpu_custom_call.1} parent=0
    _
  %s4 = ssub.s32 1, %s2
  %s5 = scalar_select 0, %s4, %s2
  $region1: #{tpu_custom_call.1} parent=0
    #allocation2 [shape = 'u8[65536]{0}', space=vmem, size = 0x10000, scoped, tag = 'input window, operand 0, single buffered']
    #allocation3 [shape = 's32[1]{0}', space=sflag, size = 0x4, scoped, tag = 'scoped memory for tpu_custom_call.1']
    %6 = vsyncpa [#allocation3], 0
    // Predicated region
    $region2: #{tpu_custom_call.1} parent=1 // pred_check
      _
    $region3: #{tpu_custom_call.1} parent=1 // pred_check_branch
      %8 = sbr.rel (0) target = $region5
    $region4: #{tpu_custom_call.1} parent=1 // pred_region
      %s10 = ssub.s32 2048, 2048
      %11 = vsyncadd [#allocation3], %s10
      %s12 = sshll.u32 [#allocation2], 4
      %s13 = int_to_ptr.vmem [resolvable:$true] %s12
      %18 = dma.hbm_to_vmem [thread:$0]  %s0, 2048, %s13, [#allocation3], 128, 128, 8
    $region5: #{tpu_custom_call.1} parent=1 // pred_fallthru
      _
    // Predicated region
    $region6: #{tpu_custom_call.1} parent=1 // pred_check
      _
    $region7: #{tpu_custom_call.1} parent=1 // pred_check_branch
      %20 = sbr.rel (0) target = $region9
    $region8: #{tpu_custom_call.1} parent=1 // pred_region
      %21 = dma.done [#allocation3], 2048
    $region9: #{tpu_custom_call.1} parent=1 // pred_fallthru
      _
    %v22 = vld [vmem:[#allocation2] sm:$0xff]
    %v23 = vld [vmem:[#allocation2 + $0x8] sm:$0xff]
    %v24 = vld [vmem:[#allocation2 + $0x10] sm:$0xff]
    %v25 = vld [vmem:[#allocation2 + $0x18] sm:$0xff]
    %v26 = vld [vmem:[#allocation2 + $0x20] sm:$0xff]
    %v27 = vld [vmem:[#allocation2 + $0x28] sm:$0xff]
    %v28 = vld [vmem:[#allocation2 + $0x30] sm:$0xff]
    %v29 = vld [vmem:[#allocation2 + $0x38] sm:$0xff]
    %v30 = vld [vmem:[#allocation2 + $0x40] sm:$0xff]
    %v31 = vld [vmem:[#allocation2 + $0x48] sm:$0xff]
    %v32 = vld [vmem:[#allocation2 + $0x50] sm:$0xff]
    %v33 = vld [vmem:[#allocation2 + $0x58] sm:$0xff]
    %v34 = vld [vmem:[#allocation2 + $0x60] sm:$0xff]
    %v35 = vld [vmem:[#allocation2 + $0x68] sm:$0xff]
    %v36 = vld [vmem:[#allocation2 + $0x70] sm:$0xff]
    %v37 = vld [vmem:[#allocation2 + $0x78] sm:$0xff]
    %vm38 = vcmask 130048
    %v39 = vsel %vm38, %v22, 0.0
    %v40 = vsel %vm38, %v23, 0.0
    %v41 = vsel %vm38, %v24, 0.0
    %v42 = vsel %vm38, %v25, 0.0
    %v43 = vsel %vm38, %v26, 0.0
    %v44 = vsel %vm38, %v27, 0.0
    %v45 = vsel %vm38, %v28, 0.0
    %v46 = vsel %vm38, %v29, 0.0
    %v47 = vsel %vm38, %v30, 0.0
    %v48 = vsel %vm38, %v31, 0.0
    %v49 = vsel %vm38, %v32, 0.0
    %v50 = vsel %vm38, %v33, 0.0
    %v51 = vsel %vm38, %v34, 0.0
    %v52 = vsel %vm38, %v35, 0.0
    %v53 = vsel %vm38, %v36, 0.0
    %v54 = vsel %vm38, %v37, 0.0
    %vm55 = vcmask 138240
    %56 = vst.msk [vmem:[%s1] sm:$0xff] %vm55, %v39
    %57 = vst.msk [vmem:[%s1 + $0x8] sm:$0xff] %vm55, %v40
    %vm58 = vcmask 131072
    %59 = vst.msk [vmem:[%s1 + $0x10] sm:$0x1] %vm58, 0.0
    %60 = vst.msk [vmem:[%s1 + $0x18] sm:$0xff] %vm55, %v41
    %61 = vst.msk [vmem:[%s1 + $0x20] sm:$0xff] %vm55, %v42
    %62 = vst.msk [vmem:[%s1 + $0x28] sm:$0x1] %vm58, 0.0
    %63 = vst.msk [vmem:[%s1 + $0x30] sm:$0xff] %vm55, %v43
    %64 = vst.msk [vmem:[%s1 + $0x38] sm:$0xff] %vm55, %v44
    %65 = vst.msk [vmem:[%s1 + $0x40] sm:$0x1] %vm58, 0.0
    %66 = vst.msk [vmem:[%s1 + $0x48] sm:$0xff] %vm55, %v45
    %67 = vst.msk [vmem:[%s1 + $0x50] sm:$0xff] %vm55, %v46
    %68 = vst.msk [vmem:[%s1 + $0x58] sm:$0x1] %vm58, 0.0
    %69 = vst.msk [vmem:[%s1 + $0x60] sm:$0xff] %vm55, %v47
    %70 = vst.msk [vmem:[%s1 + $0x68] sm:$0xff] %vm55, %v48
    %71 = vst.msk [vmem:[%s1 + $0x70] sm:$0x1] %vm58, 0.0
    %72 = vst.msk [vmem:[%s1 + $0x78] sm:$0xff] %vm55, %v49
    %73 = vst.msk [vmem:[%s1 + $0x80] sm:$0xff] %vm55, %v50
    %74 = vst.msk [vmem:[%s1 + $0x88] sm:$0x1] %vm58, 0.0
    %75 = vst.msk [vmem:[%s1 + $0x90] sm:$0xff] %vm55, %v51
    %76 = vst.msk [vmem:[%s1 + $0x98] sm:$0xff] %vm55, %v52
    %77 = vst.msk [vmem:[%s1 + $0xa0] sm:$0x1] %vm58, 0.0
    %78 = vst.msk [vmem:[%s1 + $0xa8] sm:$0xff] %vm55, %v53
    %79 = vst.msk [vmem:[%s1 + $0xb0] sm:$0xff] %vm55, %v54
    %80 = vst.msk [vmem:[%s1 + $0xb8] sm:$0x1] %vm58, 0.0
    // Predicated region
    $region10: #{tpu_custom_call.1} parent=1 // pred_check
      _
    $region11: #{tpu_custom_call.1} parent=1 // pred_check_branch
      %82 = sbr.rel (0) target = $region13
    $region12: #{tpu_custom_call.1} parent=1 // pred_region
      _
    $region13: #{tpu_custom_call.1} parent=1 // pred_fallthru
      _
    // Predicated region
    $region14: #{tpu_custom_call.1} parent=1 // pred_check
      _
    $region15: #{tpu_custom_call.1} parent=1 // pred_check_branch
      %84 = sbr.rel (0) target = $region17
    $region16: #{tpu_custom_call.1} parent=1 // pred_region
      _
    $region17: #{tpu_custom_call.1} parent=1 // pred_fallthru
      _
    %85 = vsyncpa [#allocation3], 1

</llo_original>
